<compile_context>
chip_gen: v5e
topology: v5e:2x2
jax: 0.10.0
libtpu: 0.0.40
codegen_flags: <defaults>
</compile_context>

<pallas_src>
import functools

import jax
import jax.numpy as jnp
from jax import lax
from jax.experimental import pallas as pl
from jax.experimental.pallas import tpu as pltpu


# ----------------------------------------------------------------------------------
# Trace-time constant builders (tiny; derived from static shapes + layer parameters).
# ----------------------------------------------------------------------------------
def _upsample_matrix(n_in, n_out):
    """(n_out, n_in) bilinear interpolation matrix, align_corners=True semantics."""
    rows = jnp.arange(n_out)
    src = rows.astype(jnp.float32) * (n_in - 1) / (n_out - 1)
    lo = jnp.clip(jnp.floor(src).astype(jnp.int32), 0, max(n_in - 2, 0))
    hi = jnp.minimum(lo + 1, n_in - 1)
    frac = src - lo.astype(jnp.float32)
    u = jnp.zeros((n_out, n_in), jnp.float32)
    u = u.at[rows, lo].add(1.0 - frac)
    u = u.at[rows, hi].add(frac)
    return u


def _pad_rows(u):
    """Prepend/append an all-zero row (the conv's zero padding folded into the map)."""
    n_out, n_in = u.shape
    return jnp.zeros((n_out + 2, n_in), jnp.float32).at[1:n_out + 1].set(u)


def _fold_w_upsample_into_conv(w_oihw, W, W2):
    """m[ky, w*Cin+ci, w2*Cout+co] = sum_kx Uw_pad[w2+kx, w] * w_oihw[co, ci, ky, kx]."""
    Cout, Cin = w_oihw.shape[0], w_oihw.shape[1]
    uw_pad = _pad_rows(_upsample_matrix(W, W2))                       # (W2+2, W)
    uw_sh = jnp.stack([uw_pad[kx:kx + W2] for kx in range(3)], 0)     # (3, W2, W)
    m = jnp.einsum('xvw,ocyx->ywcvo', uw_sh, w_oihw.astype(jnp.float32))
    return m.reshape(3, W * Cin, W2 * Cout)


def _h_upsample_conv_rows(H, H2):
    """uh3[h2, ky*H + h] = Uh_pad[h2 + ky, h]: H-upsample + zero pad + conv ky taps fused."""
    uh_pad = _pad_rows(_upsample_matrix(H, H2))                       # (H2+2, H)
    return jnp.concatenate([uh_pad[k:k + H2] for k in range(3)], axis=1)   # (H2, 3H)


# ----------------------------------------------------------------------------------
# Per-generation sizing
# ----------------------------------------------------------------------------------
def _device_kind():
    try:
        return jax.devices()[0].device_kind.lower()
    except Exception:
        return ""


def _vmem_limit_bytes(kind):
    if "v7" in kind or "tpu7" in kind or "7x" in kind:
        return 48 * 1024 * 1024          # v7x: 64 MiB physical per TC, leave headroom
    if any(g in kind for g in ("v4", "v5", "v6")):
        return 96 * 1024 * 1024          # 128 MiB physical VMEM
    return 32 * 1024 * 1024              # unknown chip: conservative default


def _target_strip(kind):
    return 128 if "v5" in kind else 256  # match the MXU M dim (128 on v5e, 256 on v6e/v7x)


def _pick_strip(H2, fixed_bytes, out_row_bytes, target, vmem_limit):
    """Largest multiple of 8 dividing H2, <= target, whose output block fits the budget."""
    cands = sorted(d for d in range(8, H2 + 1, 8) if H2 % d == 0) or [H2]
    budget = int(0.85 * vmem_limit) - fixed_bytes
    strip = cands[0]
    for d in cands:
        if d <= target and d * out_row_bytes <= budget:
            strip = d
    return strip


# ----------------------------------------------------------------------------------
# Kernels
# ----------------------------------------------------------------------------------
def _conv_strip(x_ref, uh3_ref, m_ref, t_ref, s, strip):
    """Bias-free (upsample + pad + conv) rows for output strip s -> (strip, W2*Cout) f32."""
    H = x_ref.shape[1]
    # Per-image part: T[ky*H + h, :] = (x2d @ m_fold[ky])[h, :].  Computed on the first
    # strip only (strip axis is 'arbitrary') and cached contiguously in VMEM scratch.
    @pl.when(s == 0)
    def _():
        x2d = x_ref[0]                                                # (H, W*Cin)
        for ky in range(3):
            t_ref[ky * H:(ky + 1) * H, :] = jnp.dot(
                x2d, m_ref[ky], preferred_element_type=jnp.float32
            ).astype(t_ref.dtype)

    # One fused MXU contraction per strip: (strip, 3H) @ (3H, W2*Cout).
    base = pl.multiple_of(s * strip, strip)
    a = uh3_ref[pl.ds(base, strip), :]                                # sublane-aligned slice
    return jnp.dot(a, t_ref[...], preferred_element_type=jnp.float32)


def _stats_kernel(x_ref, uh3_ref, m_ref, stat_ref, t_ref, *, strip):
    """Pass 1: per-image BatchNorm partial sums only; activation never written to HBM."""
    s = pl.program_id(1)

    @pl.when(s == 0)
    def _():
        stat_ref[...] = jnp.zeros_like(stat_ref)

    acc = _conv_strip(x_ref, uh3_ref, m_ref, t_ref, s, strip)         # (strip, W2*Cout) f32
    stat_ref[0, 0:1, :] += jnp.sum(acc, axis=0, keepdims=True)
    stat_ref[0, 1:2, :] += jnp.sum(acc * acc, axis=0, keepdims=True)


def _apply_kernel(x_ref, uh3_ref, m_ref, scale_ref, shift_ref, o_ref, t_ref, *, strip):
    """Pass 2: recompute the cheap conv fused with BN scale/shift + ReLU (lane-dense store)."""
    s = pl.program_id(1)
    acc = _conv_strip(x_ref, uh3_ref, m_ref, t_ref, s, strip)         # (strip, W2*Cout) f32
    o_ref[0] = jnp.maximum(acc * scale_ref[...] + shift_ref[...], 0.0).astype(o_ref.dtype)


# ----------------------------------------------------------------------------------
# Wrapper (NCHW in / NCHW out by default, matching the PyTorch module)
# ----------------------------------------------------------------------------------
def upsample_block_forward(x_nchw, w_oihw, bias, *, eps=1e-5,
                           mxu_dtype=jnp.bfloat16, strip_rows=None,
                           out_dtype=jnp.float32, channels_last=False):
    """x_nchw: (N, Cin, H, W) -> (N, Cout, 2H, 2W) (or NHWC if channels_last=True)."""
    N, Cin, H, W = x_nchw.shape
    Cout = w_oihw.shape[0]
    H2, W2 = 2 * H, 2 * W
    WCin, W2C, H3 = W * Cin, W2 * Cout, 3 * H

    kind = _device_kind()
    vmem_limit = _vmem_limit_bytes(kind)
    mb = jnp.dtype(mxu_dtype).itemsize
    ob = jnp.dtype(out_dtype).itemsize
    # Approximate fixed per-step VMEM (everything except the pass-2 output block).
    fixed = (2 * H * WCin * mb        # low-res image block (double buffered)
             + H2 * H3 * mb           # uh3 (single buffered)
             + 3 * WCin * W2C * mb    # m_fold (single buffered)
             + H3 * W2C * mb          # T scratch
             + 8 * W2C * 4)           # stats block / BN scale+shift (tiny)
    if strip_rows is not None and strip_rows % 8 == 0 and H2 % strip_rows == 0:
        strip = strip_rows
    else:
        strip = _pick_strip(H2, fixed, 2 * W2C * max(ob, 2),
                            _target_strip(kind), vmem_limit)
    n_strips = H2 // strip

    # The only layout op on the (small, low-res) input: NCHW -> (N, H, W*Cin) flat NHWC.
    x_flat = jnp.transpose(x_nchw, (0, 2, 3, 1)).reshape(N, H, WCin).astype(mxu_dtype)

    # Tiny constant operands (trace-time, from the layer parameters).
    uh3 = _h_upsample_conv_rows(H, H2).astype(mxu_dtype)                  # (H2, 3H)
    m_fold = _fold_w_upsample_into_conv(w_oihw, W, W2).astype(mxu_dtype)  # (3, WCin, W2C)

    def _resident(shape, index_map):
        # Constant-index operands: single-buffer them (no refetch, half the VMEM footprint).
        return pl.BlockSpec(shape, index_map, pipeline_mode=pl.Buffered(1))

    grid = (N, n_strips)
    common_in_specs = [
        pl.BlockSpec((1, H, WCin), lambda n, s: (n, 0, 0)),   # low-res image (per n)
        _resident((H2, H3), lambda n, s: (0, 0)),             # fused H-upsample/pad/ky taps
        _resident((3, WCin, W2C), lambda n, s: (0, 0, 0)),    # folded W-upsample + conv taps
    ]
    scratch = [pltpu.VMEM((H3, W2C), mxu_dtype)]              # per-image T cache
    cparams = pltpu.CompilerParams(
        dimension_semantics=("parallel", "arbitrary"),        # N across cores; strips reuse T
        vmem_limit_bytes=vmem_limit)

    # ---- Pass 1: fused upsample + pad + conv -> BN partial sums only ------------------
    stats = pl.pallas_call(
        functools.partial(_stats_kernel, strip=strip),
        out_shape=jax.ShapeDtypeStruct((N, 2, W2C), jnp.float32),
        grid_spec=pltpu.PrefetchScalarGridSpec(
            num_scalar_prefetch=0, grid=grid,
            in_specs=common_in_specs,
            out_specs=pl.BlockSpec((1, 2, W2C), lambda n, s: (n, 0, 0)),
            scratch_shapes=scratch),
        compiler_params=cparams,
    )(x_flat, uh3, m_fold)

    # ---- Finish the BN reduction in plain JAX (tiny: (N, 2, W2, Cout) -> (Cout,)) ------
    st = stats.reshape(N, 2, W2, Cout)
    count = jnp.float32(N * H2 * W2)
    mean = jnp.sum(st[:, 0], axis=(0, 1)) / count
    var = jnp.sum(st[:, 1], axis=(0, 1)) / count - mean * mean   # biased var (PyTorch BN)
    # TODO(synk): E[x^2]-E[x]^2 can cancel at production scale; switch to a compensated
    # two-pass variance if activations develop large means.
    gamma = jnp.ones((Cout,), jnp.float32)                       # BatchNorm2d affine defaults
    beta = jnp.zeros((Cout,), jnp.float32)
    inv_std = gamma * lax.rsqrt(var + eps)
    # The conv bias is a per-channel constant: under training-mode batch-stat BN it only
    # shifts the batch mean, so it cancels exactly in the output (gamma=1, beta=0).
    del bias
    scale_t = jnp.tile(inv_std, W2)[None, :]                     # (1, W2*Cout), f32
    shift_t = jnp.tile(beta - mean * inv_std, W2)[None, :]       # (1, W2*Cout), f32

    # ---- Pass 2: recompute conv fused with BN scale/shift + ReLU -----------------------
    out_flat = pl.pallas_call(
        functools.partial(_apply_kernel, strip=strip),
        out_shape=jax.ShapeDtypeStruct((N, H2, W2C), out_dtype),
        grid_spec=pltpu.PrefetchScalarGridSpec(
            num_scalar_prefetch=0, grid=grid,
            in_specs=common_in_specs + [
                _resident((1, W2C), lambda n, s: (0, 0)),        # BN scale (channel-tiled)
                _resident((1, W2C), lambda n, s: (0, 0)),        # BN shift (channel-tiled)
            ],
            out_specs=pl.BlockSpec((1, strip, W2C), lambda n, s: (n, s, 0)),
            scratch_shapes=scratch),
        compiler_params=cparams,
    )(x_flat, uh3, m_fold, scale_t, shift_t)

    # Lane-dense (N, H2, W2*Cout) is NHWC up to a free (metadata) reshape.
    out_nhwc = out_flat.reshape(N, H2, W2, Cout)
    if channels_last:
        return out_nhwc
    # NCHW for PyTorch parity: one XLA transpose (see TODO at top about folding it in-kernel).
    return jnp.transpose(out_nhwc, (0, 3, 1, 2))


# ----------------------------------------------------------------------------------
# Pure-JAX reference (independent formulation: gather/lerp upsample + lax.conv + BN)
# ----------------------------------------------------------------------------------
def _bilinear_upsample_x2_ref(x_nhwc):
    N, H, W, C = x_nhwc.shape
    H2, W2 = 2 * H, 2 * W

    def coords(n_out, n_in):
        src = jnp.arange(n_out, dtype=jnp.float32) * (n_in - 1) / (n_out - 1)
        lo = jnp.clip(jnp.floor(src).astype(jnp.int32), 0, max(n_in - 2, 0))
        return src - lo.astype(jnp.float32), lo, jnp.minimum(lo + 1, n_in - 1)

    fh, h0, h1 = coords(H2, H)
    fw, w0, w1 = coords(W2, W)
    xh = (x_nhwc[:, h0] * (1.0 - fh)[None, :, None, None]
          + x_nhwc[:, h1] * fh[None, :, None, None])
    return (xh[:, :, w0] * (1.0 - fw)[None, None, :, None]
            + xh[:, :, w1] * fw[None, None, :, None])


def reference_forward(x_nchw, w_oihw, bias, eps=1e-5):
    x = jnp.transpose(x_nchw, (0, 2, 3, 1)).astype(jnp.float32)
    x_up = _bilinear_upsample_x2_ref(x)
    w_hwio = jnp.transpose(w_oihw, (2, 3, 1, 0)).astype(jnp.float32)
    y = lax.conv_general_dilated(
        x_up, w_hwio, window_strides=(1, 1), padding=((1, 1), (1, 1)),
        dimension_numbers=("NHWC", "HWIO", "NHWC"))
    y = y + bias.reshape(1, 1, 1, -1)
    mean = jnp.mean(y, axis=(0, 1, 2))
    var = jnp.mean((y - mean) ** 2, axis=(0, 1, 2))
    yn = (y - mean) / jnp.sqrt(var + eps)
    return jnp.transpose(jnp.maximum(yn, 0.0), (0, 3, 1, 2))


if __name__ == "__main__":
    key = jax.random.PRNGKey(0)
    k_x, k_w, k_b = jax.random.split(key, 3)

    N, Cin, Cout, H, W = 2, 4, 8, 16, 16
    x = jax.random.normal(k_x, (N, Cin, H, W), dtype=jnp.float32)
    fan_in = Cin * 3 * 3
    bound = 1.0 / jnp.sqrt(jnp.float32(fan_in))
    w = jax.random.uniform(k_w, (Cout, Cin, 3, 3), jnp.float32, -bound, bound)
    b = jax.random.uniform(k_b, (Cout,), jnp.float32, -bound, bound)

    ref = reference_forward(x, w, b)

    # Exact-precision path: f32 MXU operands, tight tolerance.
    out_f32 = jax.block_until_ready(upsample_block_forward(x, w, b, mxu_dtype=jnp.float32))
    assert out_f32.shape == (N, Cout, 2 * H, 2 * W)
    assert jnp.allclose(out_f32, ref, rtol=1e-4, atol=1e-4), \
        float(jnp.max(jnp.abs(out_f32 - ref)))

    # Perf path (all generations — v5e's MXU is bf16-native too): bf16 MXU operands,
    # f32 accumulation / stats / BN math.
    out_bf16 = jax.block_until_ready(upsample_block_forward(x, w, b, mxu_dtype=jnp.bfloat16))
    assert jnp.allclose(out_bf16, ref, rtol=5e-2, atol=5e-2), \
        float(jnp.max(jnp.abs(out_bf16 - ref)))

    print("KERNEL_OK")
</pallas_src>

<mosaic_0001>
module attributes {stable_mosaic.version = 11 : i64} {
  func.func @_stats_kernel(%arg0: i32, %arg1: i32, %arg2: memref<1x16x64xf32, #tpu.memory_space<vmem>>, %arg3: memref<32x48xf32, #tpu.memory_space<vmem>>, %arg4: memref<3x64x256xf32, #tpu.memory_space<vmem>>, %arg5: memref<1x2x256xf32, #tpu.memory_space<vmem>>, %arg6: memref<48x256xf32, #tpu.memory_space<vmem>>) attributes {dimension_semantics = [#tpu.dimension_semantics<parallel>, #tpu.dimension_semantics<arbitrary>], iteration_bounds = array<i64: 2, 1>, scalar_prefetch = 0 : i64, scratch_operands = 1 : i64, tpu.core_type = #tpu.core_type<tc>, window_params = [{transform_indices = @transform_0, window_bounds = array<i64: 1, 16, 64>}, {pipeline_mode = #tpu.pipeline_mode<synchronous>, transform_indices = @transform_1, window_bounds = array<i64: 32, 48>}, {pipeline_mode = #tpu.pipeline_mode<synchronous>, transform_indices = @transform_2, window_bounds = array<i64: 3, 64, 256>}, {transform_indices = @transform_3, window_bounds = array<i64: 1, 2, 256>}]} {
    %c0_i32 = arith.constant 0 : i32
    %0 = arith.cmpi eq, %arg1, %c0_i32 : i32
    %1 = arith.extui %0 : i1 to i32
    %c0_i32_0 = arith.constant 0 : i32
    %2 = arith.cmpi ne, %1, %c0_i32_0 : i32
    scf.if %2 {
      %cst_18 = arith.constant 0.000000e+00 : f32
      %29 = vector.broadcast %cst_18 : f32 to vector<1x2x256xf32>
      %c0_19 = arith.constant 0 : index
      %c0_20 = arith.constant 0 : index
      %c0_21 = arith.constant 0 : index
      %30 = vector.load %arg5[%c0_19, %c0_20, %c0_21] : memref<1x2x256xf32, #tpu.memory_space<vmem>>, vector<1x2x256xf32>
      tpu.vector_store %arg5[%c0_19, %c0_20, %c0_21], %29 {strides = array<i32>} : memref<1x2x256xf32, #tpu.memory_space<vmem>>, vector<1x2x256xf32>,
    } else {
    }
    %c0_i32_1 = arith.constant 0 : i32
    %3 = arith.cmpi eq, %arg1, %c0_i32_1 : i32
    %4 = arith.extui %3 : i1 to i32
    %c0_i32_2 = arith.constant 0 : i32
    %5 = arith.cmpi ne, %4, %c0_i32_2 : i32
    scf.if %5 {
      %c0_18 = arith.constant 0 : index
      %c0_19 = arith.constant 0 : index
      %c0_20 = arith.constant 0 : index
      %29 = vector.load %arg2[%c0_18, %c0_19, %c0_20] : memref<1x16x64xf32, #tpu.memory_space<vmem>>, vector<1x16x64xf32>
      %30 = vector.shape_cast %29 : vector<1x16x64xf32> to vector<16x64xf32>
      %c0_21 = arith.constant 0 : index
      %c0_22 = arith.constant 0 : index
      %c0_23 = arith.constant 0 : index
      %31 = vector.load %arg4[%c0_21, %c0_22, %c0_23] : memref<3x64x256xf32, #tpu.memory_space<vmem>>, vector<1x64x256xf32>
      %32 = vector.shape_cast %31 : vector<1x64x256xf32> to vector<64x256xf32>
      %cst_24 = arith.constant dense<0.000000e+00> : vector<16x256xf32>
      %33 = tpu.matmul %30, %32, %cst_24 {dimension_numbers = #tpu.dot_dimension_numbers<[1], [0], [0], [1], [0, 0, 1, 1], [], []>} : vector<16x64xf32>, vector<64x256xf32>, vector<16x256xf32> -> vector<16x256xf32>
      %c0_25 = arith.constant 0 : index
      %c0_26 = arith.constant 0 : index
      %34 = vector.load %arg6[%c0_25, %c0_26] : memref<48x256xf32, #tpu.memory_space<vmem>>, vector<16x256xf32>
      tpu.vector_store %arg6[%c0_25, %c0_26], %33 {strides = array<i32>} : memref<48x256xf32, #tpu.memory_space<vmem>>, vector<16x256xf32>,
      %c1_27 = arith.constant 1 : index
      %c0_28 = arith.constant 0 : index
      %c0_29 = arith.constant 0 : index
      %35 = vector.load %arg4[%c1_27, %c0_28, %c0_29] : memref<3x64x256xf32, #tpu.memory_space<vmem>>, vector<1x64x256xf32>
      %36 = vector.shape_cast %35 : vector<1x64x256xf32> to vector<64x256xf32>
      %cst_30 = arith.constant dense<0.000000e+00> : vector<16x256xf32>
      %37 = tpu.matmul %30, %36, %cst_30 {dimension_numbers = #tpu.dot_dimension_numbers<[1], [0], [0], [1], [0, 0, 1, 1], [], []>} : vector<16x64xf32>, vector<64x256xf32>, vector<16x256xf32> -> vector<16x256xf32>
      %c16 = arith.constant 16 : index
      %c0_31 = arith.constant 0 : index
      %38 = vector.load %arg6[%c16, %c0_31] : memref<48x256xf32, #tpu.memory_space<vmem>>, vector<16x256xf32>
      tpu.vector_store %arg6[%c16, %c0_31], %37 {strides = array<i32>} : memref<48x256xf32, #tpu.memory_space<vmem>>, vector<16x256xf32>,
      %c2 = arith.constant 2 : index
      %c0_32 = arith.constant 0 : index
      %c0_33 = arith.constant 0 : index
      %39 = vector.load %arg4[%c2, %c0_32, %c0_33] : memref<3x64x256xf32, #tpu.memory_space<vmem>>, vector<1x64x256xf32>
      %40 = vector.shape_cast %39 : vector<1x64x256xf32> to vector<64x256xf32>
      %cst_34 = arith.constant dense<0.000000e+00> : vector<16x256xf32>
      %41 = tpu.matmul %30, %40, %cst_34 {dimension_numbers = #tpu.dot_dimension_numbers<[1], [0], [0], [1], [0, 0, 1, 1], [], []>} : vector<16x64xf32>, vector<64x256xf32>, vector<16x256xf32> -> vector<16x256xf32>
      %c32 = arith.constant 32 : index
      %c0_35 = arith.constant 0 : index
      %42 = vector.load %arg6[%c32, %c0_35] : memref<48x256xf32, #tpu.memory_space<vmem>>, vector<16x256xf32>
      tpu.vector_store %arg6[%c32, %c0_35], %41 {strides = array<i32>} : memref<48x256xf32, #tpu.memory_space<vmem>>, vector<16x256xf32>,
    } else {
    }
    %c32_i32 = arith.constant 32 : i32
    %6 = arith.muli %arg1, %c32_i32 : i32
    %7 = tpu.assume_multiple %6, 32 : i32
    %8 = arith.index_cast %7 : i32 to index
    %c0 = arith.constant 0 : index
    %9 = vector.load %arg3[%8, %c0] : memref<32x48xf32, #tpu.memory_space<vmem>>, vector<32x48xf32>
    %c0_3 = arith.constant 0 : index
    %c0_4 = arith.constant 0 : index
    %10 = vector.load %arg6[%c0_3, %c0_4] : memref<48x256xf32, #tpu.memory_space<vmem>>, vector<48x256xf32>
    %cst = arith.constant dense<0.000000e+00> : vector<32x256xf32>
    %11 = tpu.matmul %9, %10, %cst {dimension_numbers = #tpu.dot_dimension_numbers<[1], [0], [0], [1], [0, 0, 1, 1], [], []>} : vector<32x48xf32>, vector<48x256xf32>, vector<32x256xf32> -> vector<32x256xf32>
    %c0_5 = arith.constant 0 : index
    %c0_6 = arith.constant 0 : index
    %c0_7 = arith.constant 0 : index
    %12 = vector.load %arg5[%c0_5, %c0_6, %c0_7] : memref<1x2x256xf32, #tpu.memory_space<vmem>>, vector<1x1x256xf32>
    %13 = vector.shape_cast %12 : vector<1x1x256xf32> to vector<1x256xf32>
    %cst_8 = arith.constant dense<0.000000e+00> : vector<256xf32>
    %14 = vector.multi_reduction <add>, %11, %cst_8 [0] : vector<32x256xf32> to vector<256xf32>
    %15 = vector.shape_cast %14 : vector<256xf32> to vector<1x256xf32>
    %16 = arith.addf %13, %15 : vector<1x256xf32>
    %c0_9 = arith.constant 0 : index
    %c0_10 = arith.constant 0 : index
    %c0_11 = arith.constant 0 : index
    %17 = vector.load %arg5[%c0_9, %c0_10, %c0_11] : memref<1x2x256xf32, #tpu.memory_space<vmem>>, vector<1x1x256xf32>
    %18 = vector.shape_cast %17 : vector<1x1x256xf32> to vector<1x256xf32>
    %19 = vector.shape_cast %16 : vector<1x256xf32> to vector<1x1x256xf32>
    tpu.vector_store %arg5[%c0_9, %c0_10, %c0_11], %19 {strides = array<i32>} : memref<1x2x256xf32, #tpu.memory_space<vmem>>, vector<1x1x256xf32>,
    %c0_12 = arith.constant 0 : index
    %c1 = arith.constant 1 : index
    %c0_13 = arith.constant 0 : index
    %20 = vector.load %arg5[%c0_12, %c1, %c0_13] : memref<1x2x256xf32, #tpu.memory_space<vmem>>, vector<1x1x256xf32>
    %21 = vector.shape_cast %20 : vector<1x1x256xf32> to vector<1x256xf32>
    %22 = arith.mulf %11, %11 : vector<32x256xf32>
    %cst_14 = arith.constant dense<0.000000e+00> : vector<256xf32>
    %23 = vector.multi_reduction <add>, %22, %cst_14 [0] : vector<32x256xf32> to vector<256xf32>
    %24 = vector.shape_cast %23 : vector<256xf32> to vector<1x256xf32>
    %25 = arith.addf %21, %24 : vector<1x256xf32>
    %c0_15 = arith.constant 0 : index
    %c1_16 = arith.constant 1 : index
    %c0_17 = arith.constant 0 : index
    %26 = vector.load %arg5[%c0_15, %c1_16, %c0_17] : memref<1x2x256xf32, #tpu.memory_space<vmem>>, vector<1x1x256xf32>
    %27 = vector.shape_cast %26 : vector<1x1x256xf32> to vector<1x256xf32>
    %28 = vector.shape_cast %25 : vector<1x256xf32> to vector<1x1x256xf32>
    tpu.vector_store %arg5[%c0_15, %c1_16, %c0_17], %28 {strides = array<i32>} : memref<1x2x256xf32, #tpu.memory_space<vmem>>, vector<1x1x256xf32>,
    return
  }
  func.func @transform_0(%arg0: i32, %arg1: i32) -> (i32, i32, i32) {
    %c0_i32 = arith.constant 0 : i32
    %c0_i32_0 = arith.constant 0 : i32
    %c0_i32_1 = arith.constant 0 : i32
    return %arg0, %c0_i32, %c0_i32_0 : i32, i32, i32
  }
  func.func @transform_1(%arg0: i32, %arg1: i32) -> (i32, i32) {
    %c0_i32 = arith.constant 0 : i32
    %c0_i32_0 = arith.constant 0 : i32
    %c0_i32_1 = arith.constant 0 : i32
    return %c0_i32, %c0_i32_0 : i32, i32
  }
  func.func @transform_2(%arg0: i32, %arg1: i32) -> (i32, i32, i32) {
    %c0_i32 = arith.constant 0 : i32
    %c0_i32_0 = arith.constant 0 : i32
    %c0_i32_1 = arith.constant 0 : i32
    %c0_i32_2 = arith.constant 0 : i32
    return %c0_i32, %c0_i32_0, %c0_i32_1 : i32, i32, i32
  }
  func.func @transform_3(%arg0: i32, %arg1: i32) -> (i32, i32, i32) {
    %c0_i32 = arith.constant 0 : i32
    %c0_i32_0 = arith.constant 0 : i32
    %c0_i32_1 = arith.constant 0 : i32
    return %arg0, %c0_i32, %c0_i32_0 : i32, i32, i32
  }
}

</mosaic_0001>

<llo_original>
// kernel: tpu_custom_call.1
$region0: #{tpu_custom_call.1}
  #allocation0 [shape = 'u32[]', space=smem, size = 0x4, offset = 0x4, fixed_abs, tag = 'smem constant byte address 0x4 - core index']
  #allocation1 [shape = 'u32[72,128]{1,0:T(1,128)}', space=vmem, size = 0x9000, scoped, tag = 'internal scratch']
  #allocation2 [shape = 'f32[48,256]{1,0:T(8,128)}', space=vmem, size = 0xc000, scoped, tag = 'scratch operand']
  %s0 = inlined_call_operand.hbm [shape: f32[2,16,64], index: 0, kind: input, shape index: {}]
  %s1 = inlined_call_operand.hbm [shape: f32[32,48], index: 1, kind: input, shape index: {}]
  %s2 = inlined_call_operand.hbm [shape: f32[3,64,256], index: 2, kind: input, shape index: {}]
  %s3 = inlined_call_operand.hbm [shape: f32[2,2,256], index: 3, kind: output, shape index: {}]
  %s4 = sld [smem:[#allocation0]]
  $region61: #{tpu_custom_call.1} parent=0
    _
  %s6 = ssub.s32 1, %s4
  %s7 = scalar_select 0, %s6, %s4
  $region1: #{tpu_custom_call.1} parent=0
    #allocation3 [shape = 'u8[16384]{0}', space=vmem, size = 0x4000, scoped, tag = 'input window, operand 0']
    #allocation4 [shape = 's32[2]{0}', space=sflag, size = 0x8, scoped, tag = 'scoped memory for tpu_custom_call.1']
    #allocation5 [shape = 's32[2]{0}', space=sflag, size = 0x8, scoped, tag = 'scoped memory for tpu_custom_call.1']
    #allocation6 [shape = 'u8[16384]{0}', space=vmem, size = 0x4000, scoped, tag = 'input window, operand 1, single buffered']
    #allocation7 [shape = 's32[1]{0}', space=sflag, size = 0x4, scoped, tag = 'scoped memory for tpu_custom_call.1']
    #allocation8 [shape = 'u8[196608]{0}', space=vmem, size = 0x30000, scoped, tag = 'input window, operand 2, single buffered']
    #allocation9 [shape = 'u8[4096]{0}', space=vmem, size = 0x1000, scoped, tag = 'output window, operand 0']
    %8 = vsyncpa [#allocation4], 0
    %s9 = scalar_lea.sflag [#allocation4], 1
    %10 = vsyncpa %s9, 0
    %11 = vsyncpa [#allocation7], 0
    %12 = vsyncpa [#allocation5], 0
    %s13 = scalar_lea.sflag [#allocation5], 1
    %14 = vsyncpa %s13, 0
    loop: start=0, step=1, limit=4
    $region2: #{tpu_custom_call.1} parent=1 // loop_pre_header
      _
    $region3: #{tpu_custom_call.1} parent=1 // loop_header
      %s16 = sphi 0, %s20
      %p17 = scmp.ge.s32.totalorder %s16, 4
      %s23 = sphi 0, %s35
      %s24 = sphi 0, %s31
      %s25 = sphi 0, %s23
      %s26 = sphi 0, %s24
      %s27 = sphi 0, %s25
      %s28 = sphi 0, %s26
      %s38 = sphi 0, %s40
      %s41 = sphi 0, %s38
      %s42 = sphi 0, %s41
      %s58 = sphi 0, %s42
      %s62 = sphi 0, %s62
      %s64 = sphi 0, %s62
      %s65 = sphi 0, %s64
      %s79 = sphi 0, %s65
      %s83 = sphi 0, %s83
      %s85 = sphi 0, %s83
      %s86 = sphi 0, %s85
      %s100 = sphi 0, %s86
      %s106 = sphi 0, %s108
      %s109 = sphi 0, %s106
      %s110 = sphi 0, %s109
      %s126 = sphi 0, %s110
    $region4: #{tpu_custom_call.1} parent=1 // loop_header_branch
      %19 = sbr.rel (%p17) target = $region8
    $region5: #{tpu_custom_call.1} parent=1 // loop_body
      %s21 = ssub.s32 %s16, 1
      %s22 = ssub.s32 %s16, 2
      %s29 = sadd.s32 1, %s24
      %p30 = scmp.ge.s32.totalorder %s29, 1
      %s31 = scalar_select %p30, 0, %s29
      %s32 = sadd.s32 1, %s23
      %s33 = scalar_select %p30, %s32, %s23
      %p34 = scmp.ge.s32.totalorder %s33, 2
      %s35 = scalar_select %p34, 0, %s33
      %s36 = ssub.s32 %s23, %s35
      %p37 = scmp.eq.s32.totalorder %s36, 0
      %s39 = sadd.s32 %s38, 1
      %s40 = scalar_select %p37, %s38, %s39
      %p43 = pneg %p37
      %p44 = scmp.eq.s32.totalorder %s16, 1
      %p45 = por %p43, %p44
      %p46 = scmp.ne.s32.totalorder %s38, %s41
      %p47 = scmp.eq.s32.totalorder %s16, 0
      %p48 = por %p46, %p47
      %p49 = scmp.ne.s32.totalorder %s38, %s41
      %p50 = scmp.eq.s32.totalorder %s21, 1
      %p51 = por %p49, %p50
      %p52 = scmp.ne.s32.totalorder %s41, %s42
      %p53 = scmp.eq.s32.totalorder %s21, 0
      %p54 = por %p52, %p53
      %p55 = scmp.ne.s32.totalorder %s41, %s42
      %p56 = scmp.eq.s32.totalorder %s22, 1
      %p57 = por %p55, %p56
      %p59 = scmp.ne.s32.totalorder %s42, %s58
      %p60 = scmp.eq.s32.totalorder %s22, 0
      %p61 = por %p59, %p60
      %s63 = sadd.s32 %s62, 1
      %p66 = scmp.eq.s32.totalorder %s16, 1
      %p67 = scmp.ne.s32.totalorder %s62, %s64
      %p68 = scmp.eq.s32.totalorder %s16, 0
      %p69 = por %p67, %p68
      %p70 = scmp.ne.s32.totalorder %s62, %s64
      %p71 = scmp.eq.s32.totalorder %s21, 1
      %p72 = por %p70, %p71
      %p73 = scmp.ne.s32.totalorder %s64, %s65
      %p74 = scmp.eq.s32.totalorder %s21, 0
      %p75 = por %p73, %p74
      %p76 = scmp.ne.s32.totalorder %s64, %s65
      %p77 = scmp.eq.s32.totalorder %s22, 1
      %p78 = por %p76, %p77
      %p80 = scmp.ne.s32.totalorder %s65, %s79
      %p81 = scmp.eq.s32.totalorder %s22, 0
      %p82 = por %p80, %p81
      %s84 = sadd.s32 %s83, 1
      %p87 = scmp.eq.s32.totalorder %s16, 1
      %p88 = scmp.ne.s32.totalorder %s83, %s85
      %p89 = scmp.eq.s32.totalorder %s16, 0
      %p90 = por %p88, %p89
      %p91 = scmp.ne.s32.totalorder %s83, %s85
      %p92 = scmp.eq.s32.totalorder %s21, 1
      %p93 = por %p91, %p92
      %p94 = scmp.ne.s32.totalorder %s85, %s86
      %p95 = scmp.eq.s32.totalorder %s21, 0
      %p96 = por %p94, %p95
      %p97 = scmp.ne.s32.totalorder %s85, %s86
      %p98 = scmp.eq.s32.totalorder %s22, 1
      %p99 = por %p97, %p98
      %p101 = scmp.ne.s32.totalorder %s86, %s100
      %p102 = scmp.eq.s32.totalorder %s22, 0
      %p103 = por %p101, %p102
      %s104 = ssub.s32 %s23, %s35
      %p105 = scmp.eq.s32.totalorder %s104, 0
      %s107 = sadd.s32 %s106, 1
      %s108 = scalar_select %p105, %s106, %s107
      %p111 = pneg %p105
      %p112 = scmp.eq.s32.totalorder %s16, 1
      %p113 = por %p111, %p112
      %p114 = scmp.ne.s32.totalorder %s106, %s109
      %p115 = scmp.eq.s32.totalorder %s16, 0
      %p116 = por %p114, %p115
      %p117 = scmp.ne.s32.totalorder %s106, %s109
      %p118 = scmp.eq.s32.totalorder %s21, 1
      %p119 = por %p117, %p118
      %p120 = scmp.ne.s32.totalorder %s109, %s110
      %p121 = scmp.eq.s32.totalorder %s21, 0
      %p122 = por %p120, %p121
      %p123 = scmp.ne.s32.totalorder %s109, %s110
      %p124 = scmp.eq.s32.totalorder %s22, 1
      %p125 = por %p123, %p124
      %p127 = scmp.ne.s32.totalorder %s110, %s126
      %p128 = scmp.eq.s32.totalorder %s22, 0
      %p129 = por %p127, %p128
      %p130 = scmp.le.s32.totalorder 1, %s16
      %p131 = scmp.lt.s32.totalorder %s16, 3
      %p132 = pnand %p130, %p131
      %p133 = pneg %p132
      // Predicated region
      $region9: #{tpu_custom_call.1} parent=5 // pred_check
        _
      $region10: #{tpu_custom_call.1} parent=5 // pred_check_branch
        %135 = sbr.rel (%p132) target = $region12
      $region11: #{tpu_custom_call.1} parent=5 // pred_region
        %s136 = ssub.s32 %s16, 1
        // Predicated region
        $region13: #{tpu_custom_call.1} parent=11 // pred_check
          %p137 = pneg %p75
        $region14: #{tpu_custom_call.1} parent=11 // pred_check_branch
          %139 = sbr.rel (%p137) target = $region16
        $region15: #{tpu_custom_call.1} parent=11 // pred_region
          %141 = vsyncadd [#allocation7], 0
          %s142 = sshll.u32 %s1, 4
          %s143 = int_to_ptr.hbm [resolvable:$true] %s142
          %s144 = sshll.u32 [#allocation6], 4
          %s145 = int_to_ptr.vmem [resolvable:$true] %s144
          %150 = dma.hbm_to_vmem [thread:$0]  %s143, 512, %s145, [#allocation7], 128, 128, 8
        $region16: #{tpu_custom_call.1} parent=11 // pred_fallthru
          _
        // Predicated region
        $region17: #{tpu_custom_call.1} parent=11 // pred_check
          %p151 = pneg %p96
        $region18: #{tpu_custom_call.1} parent=11 // pred_check_branch
          %153 = sbr.rel (%p151) target = $region20
        $region19: #{tpu_custom_call.1} parent=11 // pred_region
          %155 = vsyncadd [#allocation7], 0
          %s156 = sshll.u32 %s2, 4
          %s157 = int_to_ptr.hbm [resolvable:$true] %s156
          %s158 = sshll.u32 [#allocation8], 4
          %s159 = int_to_ptr.vmem [resolvable:$true] %s158
          %164 = dma.hbm_to_vmem [thread:$0]  %s157, 6144, %s159, [#allocation7], 256, 256, 16
        $region20: #{tpu_custom_call.1} parent=11 // pred_fallthru
          _
      $region12: #{tpu_custom_call.1} parent=5 // pred_fallthru
        _
      %p165 = scmp.lt.s32.totalorder %s16, 2
      // Predicated region
      $region21: #{tpu_custom_call.1} parent=5 // pred_check
        %p166 = pneg %p165
      $region22: #{tpu_custom_call.1} parent=5 // pred_check_branch
        %168 = sbr.rel (%p166) target = $region24
      $region23: #{tpu_custom_call.1} parent=5 // pred_region
        // Predicated region
        $region25: #{tpu_custom_call.1} parent=23 // pred_check
          %p169 = pneg %p48
        $region26: #{tpu_custom_call.1} parent=23 // pred_check_branch
          %171 = sbr.rel (%p169) target = $region28
        $region27: #{tpu_custom_call.1} parent=23 // pred_region
          %s172 = sand.u32 %s38, 1
          %s173 = scalar_lea.sflag [#allocation4], %s172
          %s174 = sand.u32 %s38, 1
          %s175 = smul.addr %s174, 16
          %s176 = scalar_lea.vmem [#allocation3], %s175
          %178 = vsyncadd %s173, 0
          %s179 = smul.addr %s23, 2
          %s180 = smul.addr %s179, 8
          %s181 = scalar_lea.hbm %s0, %s180
          %s182 = sshll.u32 %s181, 4
          %s183 = int_to_ptr.hbm [resolvable:$true] %s182
          %s184 = sshll.u32 %s176, 4
          %s185 = int_to_ptr.vmem [resolvable:$true] %s184
          %190 = dma.hbm_to_vmem [thread:$0]  %s183, 256, %s185, %s173, 128, 128, 8
        $region28: #{tpu_custom_call.1} parent=23 // pred_fallthru
          _
      $region24: #{tpu_custom_call.1} parent=5 // pred_fallthru
        _
      %p191 = scmp.le.s32.totalorder 1, %s16
      %p192 = scmp.lt.s32.totalorder %s16, 3
      %p193 = pnand %p191, %p192
      %p194 = pneg %p193
      // Predicated region
      $region29: #{tpu_custom_call.1} parent=5 // pred_check
        _
      $region30: #{tpu_custom_call.1} parent=5 // pred_check_branch
        %196 = sbr.rel (%p193) target = $region32
      $region31: #{tpu_custom_call.1} parent=5 // pred_region
        %s197 = ssub.s32 %s16, 1
        %s198 = sand.u32 %s41, 1
        %s199 = scalar_lea.sflag [#allocation4], %s198
        %s200 = sand.u32 %s41, 1
        %s201 = smul.addr %s200, 16
        %s202 = scalar_lea.vmem [#allocation3], %s201
        // Predicated region
        $region33: #{tpu_custom_call.1} parent=31 // pred_check
          %p203 = pneg %p54
        $region34: #{tpu_custom_call.1} parent=31 // pred_check_branch
          %205 = sbr.rel (%p203) target = $region36
        $region35: #{tpu_custom_call.1} parent=31 // pred_region
          %207 = dma.done %s199, 256
        $region36: #{tpu_custom_call.1} parent=31 // pred_fallthru
          _
        // Predicated region
        $region37: #{tpu_custom_call.1} parent=31 // pred_check
          %p208 = pneg %p75
        $region38: #{tpu_custom_call.1} parent=31 // pred_check_branch
          %210 = sbr.rel (%p208) target = $region40
        $region39: #{tpu_custom_call.1} parent=31 // pred_region
          %212 = dma.done [#allocation7], 512
        $region40: #{tpu_custom_call.1} parent=31 // pred_fallthru
          _
        // Predicated region
        $region41: #{tpu_custom_call.1} parent=31 // pred_check
          %p213 = pneg %p96
        $region42: #{tpu_custom_call.1} parent=31 // pred_check_branch
          %215 = sbr.rel (%p213) target = $region44
        $region43: #{tpu_custom_call.1} parent=31 // pred_region
          %217 = dma.done [#allocation7], 6144
        $region44: #{tpu_custom_call.1} parent=31 // pred_fallthru
          _
        %s218 = sand.u32 %s41, 1
        %s219 = scalar_lea.sflag [#allocation4], %s218
        %s220 = sand.u32 %s41, 1
        %s221 = smul.addr %s220, 16
        %s222 = scalar_lea.vmem [#allocation3], %s221
        %p223 = pneg %p54
        %p224 = pneg %p51
        %p225 = pneg %p75
        %p226 = pneg %p72
        %p227 = pneg %p96
        %p228 = pneg %p93
        %p229 = pneg %p122
        %p230 = pneg %p119
        %s231 = sand.u32 %s109, 1
        %s232 = scalar_lea.sflag [#allocation5], %s231
        %s233 = sand.u32 %s109, 1
        %s234 = smul.addr %s233, 4
        %s235 = scalar_lea.vmem [#allocation9], %s234
        %p236 = scmp.eq.s32.totalorder %s26, 0
        // Predicated region
        $region45: #{tpu_custom_call.1} parent=31 // pred_check
          %p237 = pneg %p236
        $region46: #{tpu_custom_call.1} parent=31 // pred_check_branch
          %239 = sbr.rel (%p237) target = $region48
        $region47: #{tpu_custom_call.1} parent=31 // pred_region
          %240 = vst [vmem:[%s235] sm:$0xf] 0.0
          %v241 = vld [vmem:[%s202] sm:$0xff]
          %v242 = vld [vmem:[%s202 + $0x8] sm:$0xff]
          %v243 = vld [vmem:[#allocation8] sm:$0xff]
          %v244 = vld [vmem:[#allocation8 + $0x8] sm:$0xff]
          %v245 = vld [vmem:[#allocation8 + $0x10] sm:$0xff]
          %v246 = vld [vmem:[#allocation8 + $0x18] sm:$0xff]
          %v247 = vld [vmem:[#allocation8 + $0x20] sm:$0xff]
          %v248 = vld [vmem:[#allocation8 + $0x28] sm:$0xff]
          %v249 = vld [vmem:[#allocation8 + $0x30] sm:$0xff]
          %v250 = vld [vmem:[#allocation8 + $0x38] sm:$0xff]
          %v251 = vld [vmem:[#allocation8 + $0x40] sm:$0xff]
          %v252 = vld [vmem:[#allocation8 + $0x48] sm:$0xff]
          %v253 = vld [vmem:[#allocation8 + $0x50] sm:$0xff]
          %v254 = vld [vmem:[#allocation8 + $0x58] sm:$0xff]
          %v255 = vld [vmem:[#allocation8 + $0x60] sm:$0xff]
          %v256 = vld [vmem:[#allocation8 + $0x68] sm:$0xff]
          %v257 = vld [vmem:[#allocation8 + $0x70] sm:$0xff]
          %v258 = vld [vmem:[#allocation8 + $0x78] sm:$0xff]
          %vm259 = vcmask 523264
          %v261 = vsel %vm259, %v241, 0
          %v264 = vsel %vm259, %v242, 0
          %266 = vmatpush.msra.mxu0 0.0
          %267 = vmatpush.msra.mxu0 0.0
          %268 = vmatpush.msra.mxu0 0.0
          %269 = vmatpush.msra.mxu0 0.0
          %270 = vmatpush.msra.mxu0 0.0
          %271 = vmatpush.msra.mxu0 0.0
          %272 = vmatpush.msra.mxu0 0.0
          %273 = vmatpush.msra.mxu0 0.0
          %274 = vmatpush.msra.mxu0 %v257
          %275 = vmatpush.msra.mxu0 %v255
          %276 = vmatpush.msra.mxu0 %v253
          %277 = vmatpush.msra.mxu0 %v251
          %278 = vmatpush.msra.mxu0 %v249
          %279 = vmatpush.msra.mxu0 %v247
          %280 = vmatpush.msra.mxu0 %v245
          %281 = vmatpush.msra.mxu0 %v243
          %282 = vmatmul.f32.gmra.mxu0 %v261
          %v283 = vpop.f32.mrf.mxu0
          %v284 = vadd.f32 0.0, %v283
          %285 = vmatmul.f32.gmra.mxu0 %v264
          %v286 = vpop.f32.mrf.mxu0
          %v287 = vadd.f32 0.0, %v286
          %288 = vdwg.mxu0
          %289 = vmatpush.msra.mxu0 0.0
          %290 = vmatpush.msra.mxu0 0.0
          %291 = vmatpush.msra.mxu0 0.0
          %292 = vmatpush.msra.mxu0 0.0
          %293 = vmatpush.msra.mxu0 0.0
          %294 = vmatpush.msra.mxu0 0.0
          %295 = vmatpush.msra.mxu0 0.0
          %296 = vmatpush.msra.mxu0 0.0
          %297 = vmatpush.msra.mxu0 %v258
          %298 = vmatpush.msra.mxu0 %v256
          %299 = vmatpush.msra.mxu0 %v254
          %300 = vmatpush.msra.mxu0 %v252
          %301 = vmatpush.msra.mxu0 %v250
          %302 = vmatpush.msra.mxu0 %v248
          %303 = vmatpush.msra.mxu0 %v246
          %304 = vmatpush.msra.mxu0 %v244
          %305 = vmatmul.f32.gmra.mxu0 %v261
          %v306 = vpop.f32.mrf.mxu0
          %v307 = vadd.f32 0.0, %v306
          %308 = vmatmul.f32.gmra.mxu0 %v264
          %v309 = vpop.f32.mrf.mxu0
          %v310 = vadd.f32 0.0, %v309
          %311 = vdwg.mxu0
          %312 = vst [vmem:[#allocation2] sm:$0xff] %v284
          %313 = vst [vmem:[#allocation2 + $0x8] sm:$0xff] %v307
          %314 = vst [vmem:[#allocation2 + $0x10] sm:$0xff] %v287
          %315 = vst [vmem:[#allocation2 + $0x18] sm:$0xff] %v310
          %s316 = scalar_lea.vmem [#allocation8], 128
          %v317 = vld [vmem:[%s316] sm:$0xff]
          %v318 = vld [vmem:[%s316 + $0x8] sm:$0xff]
          %v319 = vld [vmem:[%s316 + $0x10] sm:$0xff]
          %v320 = vld [vmem:[%s316 + $0x18] sm:$0xff]
          %v321 = vld [vmem:[%s316 + $0x20] sm:$0xff]
          %v322 = vld [vmem:[%s316 + $0x28] sm:$0xff]
          %v323 = vld [vmem:[%s316 + $0x30] sm:$0xff]
          %v324 = vld [vmem:[%s316 + $0x38] sm:$0xff]
          %v325 = vld [vmem:[%s316 + $0x40] sm:$0xff]
          %v326 = vld [vmem:[%s316 + $0x48] sm:$0xff]
          %v327 = vld [vmem:[%s316 + $0x50] sm:$0xff]
          %v328 = vld [vmem:[%s316 + $0x58] sm:$0xff]
          %v329 = vld [vmem:[%s316 + $0x60] sm:$0xff]
          %v330 = vld [vmem:[%s316 + $0x68] sm:$0xff]
          %v331 = vld [vmem:[%s316 + $0x70] sm:$0xff]
          %v332 = vld [vmem:[%s316 + $0x78] sm:$0xff]
          %333 = vmatpush.msra.mxu0 0.0
          %334 = vmatpush.msra.mxu0 0.0
          %335 = vmatpush.msra.mxu0 0.0
          %336 = vmatpush.msra.mxu0 0.0
          %337 = vmatpush.msra.mxu0 0.0
          %338 = vmatpush.msra.mxu0 0.0
          %339 = vmatpush.msra.mxu0 0.0
          %340 = vmatpush.msra.mxu0 0.0
          %341 = vmatpush.msra.mxu0 %v331
          %342 = vmatpush.msra.mxu0 %v329
          %343 = vmatpush.msra.mxu0 %v327
          %344 = vmatpush.msra.mxu0 %v325
          %345 = vmatpush.msra.mxu0 %v323
          %346 = vmatpush.msra.mxu0 %v321
          %347 = vmatpush.msra.mxu0 %v319
          %348 = vmatpush.msra.mxu0 %v317
          %349 = vmatmul.f32.gmra.mxu0 %v261
          %v350 = vpop.f32.mrf.mxu0
          %v351 = vadd.f32 0.0, %v350
          %352 = vmatmul.f32.gmra.mxu0 %v264
          %v353 = vpop.f32.mrf.mxu0
          %v354 = vadd.f32 0.0, %v353
          %355 = vdwg.mxu0
          %356 = vmatpush.msra.mxu0 0.0
          %357 = vmatpush.msra.mxu0 0.0
          %358 = vmatpush.msra.mxu0 0.0
          %359 = vmatpush.msra.mxu0 0.0
          %360 = vmatpush.msra.mxu0 0.0
          %361 = vmatpush.msra.mxu0 0.0
          %362 = vmatpush.msra.mxu0 0.0
          %363 = vmatpush.msra.mxu0 0.0
          %364 = vmatpush.msra.mxu0 %v332
          %365 = vmatpush.msra.mxu0 %v330
          %366 = vmatpush.msra.mxu0 %v328
          %367 = vmatpush.msra.mxu0 %v326
          %368 = vmatpush.msra.mxu0 %v324
          %369 = vmatpush.msra.mxu0 %v322
          %370 = vmatpush.msra.mxu0 %v320
          %371 = vmatpush.msra.mxu0 %v318
          %372 = vmatmul.f32.gmra.mxu0 %v261
          %v373 = vpop.f32.mrf.mxu0
          %v374 = vadd.f32 0.0, %v373
          %375 = vmatmul.f32.gmra.mxu0 %v264
          %v376 = vpop.f32.mrf.mxu0
          %v377 = vadd.f32 0.0, %v376
          %378 = vdwg.mxu0
          %379 = vst [vmem:[#allocation2 + $0x20] sm:$0xff] %v351
          %380 = vst [vmem:[#allocation2 + $0x28] sm:$0xff] %v374
          %381 = vst [vmem:[#allocation2 + $0x30] sm:$0xff] %v354
          %382 = vst [vmem:[#allocation2 + $0x38] sm:$0xff] %v377
          %s383 = scalar_lea.vmem [#allocation8], 256
          %v384 = vld [vmem:[%s383] sm:$0xff]
          %v385 = vld [vmem:[%s383 + $0x8] sm:$0xff]
          %v386 = vld [vmem:[%s383 + $0x10] sm:$0xff]
          %v387 = vld [vmem:[%s383 + $0x18] sm:$0xff]
          %v388 = vld [vmem:[%s383 + $0x20] sm:$0xff]
          %v389 = vld [vmem:[%s383 + $0x28] sm:$0xff]
          %v390 = vld [vmem:[%s383 + $0x30] sm:$0xff]
          %v391 = vld [vmem:[%s383 + $0x38] sm:$0xff]
          %v392 = vld [vmem:[%s383 + $0x40] sm:$0xff]
          %v393 = vld [vmem:[%s383 + $0x48] sm:$0xff]
          %v394 = vld [vmem:[%s383 + $0x50] sm:$0xff]
          %v395 = vld [vmem:[%s383 + $0x58] sm:$0xff]
          %v396 = vld [vmem:[%s383 + $0x60] sm:$0xff]
          %v397 = vld [vmem:[%s383 + $0x68] sm:$0xff]
          %v398 = vld [vmem:[%s383 + $0x70] sm:$0xff]
          %v399 = vld [vmem:[%s383 + $0x78] sm:$0xff]
          %400 = vmatpush.msra.mxu0 0.0
          %401 = vmatpush.msra.mxu0 0.0
          %402 = vmatpush.msra.mxu0 0.0
          %403 = vmatpush.msra.mxu0 0.0
          %404 = vmatpush.msra.mxu0 0.0
          %405 = vmatpush.msra.mxu0 0.0
          %406 = vmatpush.msra.mxu0 0.0
          %407 = vmatpush.msra.mxu0 0.0
          %408 = vmatpush.msra.mxu0 %v398
          %409 = vmatpush.msra.mxu0 %v396
          %410 = vmatpush.msra.mxu0 %v394
          %411 = vmatpush.msra.mxu0 %v392
          %412 = vmatpush.msra.mxu0 %v390
          %413 = vmatpush.msra.mxu0 %v388
          %414 = vmatpush.msra.mxu0 %v386
          %415 = vmatpush.msra.mxu0 %v384
          %416 = vmatmul.f32.gmra.mxu0 %v261
          %v417 = vpop.f32.mrf.mxu0
          %v418 = vadd.f32 0.0, %v417
          %419 = vmatmul.f32.gmra.mxu0 %v264
          %v420 = vpop.f32.mrf.mxu0
          %v421 = vadd.f32 0.0, %v420
          %422 = vdwg.mxu0
          %423 = vmatpush.msra.mxu0 0.0
          %424 = vmatpush.msra.mxu0 0.0
          %425 = vmatpush.msra.mxu0 0.0
          %426 = vmatpush.msra.mxu0 0.0
          %427 = vmatpush.msra.mxu0 0.0
          %428 = vmatpush.msra.mxu0 0.0
          %429 = vmatpush.msra.mxu0 0.0
          %430 = vmatpush.msra.mxu0 0.0
          %431 = vmatpush.msra.mxu0 %v399
          %432 = vmatpush.msra.mxu0 %v397
          %433 = vmatpush.msra.mxu0 %v395
          %434 = vmatpush.msra.mxu0 %v393
          %435 = vmatpush.msra.mxu0 %v391
          %436 = vmatpush.msra.mxu0 %v389
          %437 = vmatpush.msra.mxu0 %v387
          %438 = vmatpush.msra.mxu0 %v385
          %439 = vmatmul.f32.gmra.mxu0 %v261
          %v440 = vpop.f32.mrf.mxu0
          %v441 = vadd.f32 0.0, %v440
          %442 = vmatmul.f32.gmra.mxu0 %v264
          %v443 = vpop.f32.mrf.mxu0
          %v444 = vadd.f32 0.0, %v443
          %445 = vdwg.mxu0
          %446 = vst [vmem:[#allocation2 + $0x40] sm:$0xff] %v418
          %447 = vst [vmem:[#allocation2 + $0x48] sm:$0xff] %v441
          %448 = vst [vmem:[#allocation2 + $0x50] sm:$0xff] %v421
          %449 = vst [vmem:[#allocation2 + $0x58] sm:$0xff] %v444
        $region48: #{tpu_custom_call.1} parent=31 // pred_fallthru
          _
        %s450 = smul.u32 %s26, 32
        %s451 = scalar_lea.vmem [#allocation6], %s450
        %v452 = vld [vmem:[%s451] sm:$0xff]
        %v453 = vld [vmem:[%s451 + $0x8] sm:$0xff]
        %v454 = vld [vmem:[%s451 + $0x10] sm:$0xff]
        %v455 = vld [vmem:[%s451 + $0x18] sm:$0xff]
        %v456 = vld [vmem:[#allocation2] sm:$0xff]
        %v457 = vld [vmem:[#allocation2 + $0x8] sm:$0xff]
        %v458 = vld [vmem:[#allocation2 + $0x10] sm:$0xff]
        %v459 = vld [vmem:[#allocation2 + $0x18] sm:$0xff]
        %v460 = vld [vmem:[#allocation2 + $0x20] sm:$0xff]
        %v461 = vld [vmem:[#allocation2 + $0x28] sm:$0xff]
        %v462 = vld [vmem:[#allocation2 + $0x30] sm:$0xff]
        %v463 = vld [vmem:[#allocation2 + $0x38] sm:$0xff]
        %v464 = vld [vmem:[#allocation2 + $0x40] sm:$0xff]
        %v465 = vld [vmem:[#allocation2 + $0x48] sm:$0xff]
        %v466 = vld [vmem:[#allocation2 + $0x50] sm:$0xff]
        %v467 = vld [vmem:[#allocation2 + $0x58] sm:$0xff]
        %vm468 = vcmask 392192
        %v470 = vsel %vm468, %v452, 0
        %v473 = vsel %vm468, %v453, 0
        %v476 = vsel %vm468, %v454, 0
        %v479 = vsel %vm468, %v455, 0
        %481 = vmatpush.msra.mxu0 0.0
        %482 = vmatpush.msra.mxu0 0.0
        %483 = vmatpush.msra.mxu0 0.0
        %484 = vmatpush.msra.mxu0 0.0
        %485 = vmatpush.msra.mxu0 0.0
        %486 = vmatpush.msra.mxu0 0.0
        %487 = vmatpush.msra.mxu0 0.0
        %488 = vmatpush.msra.mxu0 0.0
        %489 = vmatpush.msra.mxu0 0.0
        %490 = vmatpush.msra.mxu0 0.0
        %491 = vmatpush.msra.mxu0 %v466
        %492 = vmatpush.msra.mxu0 %v464
        %493 = vmatpush.msra.mxu0 %v462
        %494 = vmatpush.msra.mxu0 %v460
        %495 = vmatpush.msra.mxu0 %v458
        %496 = vmatpush.msra.mxu0 %v456
        %497 = vmatmul.f32.gmra.mxu0 %v470
        %v498 = vpop.f32.mrf.mxu0
        %v499 = vadd.f32 0.0, %v498
        %500 = vmatmul.f32.gmra.mxu0 %v473
        %v501 = vpop.f32.mrf.mxu0
        %v502 = vadd.f32 0.0, %v501
        %503 = vmatmul.f32.gmra.mxu0 %v476
        %v504 = vpop.f32.mrf.mxu0
        %v505 = vadd.f32 0.0, %v504
        %506 = vmatmul.f32.gmra.mxu0 %v479
        %v507 = vpop.f32.mrf.mxu0
        %v508 = vadd.f32 0.0, %v507
        %509 = vdwg.mxu0
        %510 = vmatpush.msra.mxu0 0.0
        %511 = vmatpush.msra.mxu0 0.0
        %512 = vmatpush.msra.mxu0 0.0
        %513 = vmatpush.msra.mxu0 0.0
        %514 = vmatpush.msra.mxu0 0.0
        %515 = vmatpush.msra.mxu0 0.0
        %516 = vmatpush.msra.mxu0 0.0
        %517 = vmatpush.msra.mxu0 0.0
        %518 = vmatpush.msra.mxu0 0.0
        %519 = vmatpush.msra.mxu0 0.0
        %520 = vmatpush.msra.mxu0 %v467
        %521 = vmatpush.msra.mxu0 %v465
        %522 = vmatpush.msra.mxu0 %v463
        %523 = vmatpush.msra.mxu0 %v461
        %524 = vmatpush.msra.mxu0 %v459
        %525 = vmatpush.msra.mxu0 %v457
        %526 = vmatmul.f32.gmra.mxu0 %v470
        %v527 = vpop.f32.mrf.mxu0
        %v528 = vadd.f32 0.0, %v527
        %529 = vmatmul.f32.gmra.mxu0 %v473
        %v530 = vpop.f32.mrf.mxu0
        %v531 = vadd.f32 0.0, %v530
        %532 = vmatmul.f32.gmra.mxu0 %v476
        %v533 = vpop.f32.mrf.mxu0
        %v534 = vadd.f32 0.0, %v533
        %535 = vmatmul.f32.gmra.mxu0 %v479
        %v536 = vpop.f32.mrf.mxu0
        %v537 = vadd.f32 0.0, %v536
        %538 = vdwg.mxu0
        %v539 = vld [vmem:[%s235] ss:$2 sm:$0x3]
        %v540 = vadd.f32 %v499, %v502
        %v541 = vadd.f32 %v540, %v505
        %v542 = vadd.f32 %v541, %v508
        %v543 = vrot.slane %v542, 4
        %v544 = vadd.f32 %v542, %v543
        %v545 = vrot.slane %v544, 2
        %v546 = vadd.f32 %v544, %v545
        %v547 = vrot.slane %v546, 1
        %v548 = vadd.f32 %v546, %v547
        %v549 = vadd.f32 %v528, %v531
        %v550 = vadd.f32 %v549, %v534
        %v551 = vadd.f32 %v550, %v537
        %v552 = vrot.slane %v551, 4
        %v553 = vadd.f32 %v551, %v552
        %v554 = vrot.slane %v553, 2
        %v555 = vadd.f32 %v553, %v554
        %v556 = vrot.slane %v555, 1
        %v557 = vadd.f32 %v555, %v556
        %v560 = vrot.slane %v557, 7
        %vm561 = vcmask 1040384
        %v562 = vsel %vm561, %v548, %v560
        %v564 = vadd.f32 %v539, %v562
        %v565 = vlaneseq
        %vm566 = vcmp.ge.s32.totalorder %v565, 0
        %vm567 = vcmp.lt.s32.totalorder %v565, 256
        %vm568 = vmand %vm566, %vm567
        %569 = vst.msk [vmem:[%s235] ss:$2 sm:$0x3] %vm568, %v564
        %s570 = scalar_lea.vmem %s235, 1 [#allocation9]
        %v571 = vld [vmem:[%s570] ss:$2 sm:$0x3]
        %v572 = vmul.f32 %v499, %v499
        %v573 = vmul.f32 %v528, %v528
        %v574 = vmul.f32 %v502, %v502
        %v575 = vmul.f32 %v531, %v531
        %v576 = vmul.f32 %v505, %v505
        %v577 = vmul.f32 %v534, %v534
        %v578 = vmul.f32 %v508, %v508
        %v579 = vmul.f32 %v537, %v537
        %v580 = vadd.f32 %v572, %v574
        %v581 = vadd.f32 %v580, %v576
        %v582 = vadd.f32 %v581, %v578
        %v583 = vrot.slane %v582, 4
        %v584 = vadd.f32 %v582, %v583
        %v585 = vrot.slane %v584, 2
        %v586 = vadd.f32 %v584, %v585
        %v587 = vrot.slane %v586, 1
        %v588 = vadd.f32 %v586, %v587
        %v589 = vadd.f32 %v573, %v575
        %v590 = vadd.f32 %v589, %v577
        %v591 = vadd.f32 %v590, %v579
        %v592 = vrot.slane %v591, 4
        %v593 = vadd.f32 %v591, %v592
        %v594 = vrot.slane %v593, 2
        %v595 = vadd.f32 %v593, %v594
        %v596 = vrot.slane %v595, 1
        %v597 = vadd.f32 %v595, %v596
        %v600 = vrot.slane %v597, 7
        %v601 = vsel %vm561, %v588, %v600
        %v603 = vadd.f32 %v571, %v601
        %604 = vst.msk [vmem:[%s570] ss:$2 sm:$0x3] %vm568, %v603
        %s605 = sand.u32 %s109, 1
        %s606 = scalar_lea.sflag [#allocation5], %s605
        %s607 = sand.u32 %s109, 1
        %s608 = smul.addr %s607, 4
        %s609 = scalar_lea.vmem [#allocation9], %s608
        // Predicated region
        $region49: #{tpu_custom_call.1} parent=31 // pred_check
          %p610 = pneg %p119
        $region50: #{tpu_custom_call.1} parent=31 // pred_check_branch
          %612 = sbr.rel (%p610) target = $region52
        $region51: #{tpu_custom_call.1} parent=31 // pred_region
          %614 = vsyncadd %s606, 0
          %s615 = smul.addr %s25, 2
          %s616 = smul.addr %s615, 2
          %s617 = scalar_lea.hbm %s3, %s616
          %s619 = sshll.u32 %s609, 4
          %s620 = int_to_ptr.vmem [resolvable:$true] %s619
          %s621 = sshll.u32 %s617, 4
          %s622 = int_to_ptr.hbm [resolvable:$true] %s621
          %624 = dma.vmem_to_hbm [thread:$0]  %s620, 64, %s622, %s606
        $region52: #{tpu_custom_call.1} parent=31 // pred_fallthru
          _
      $region32: #{tpu_custom_call.1} parent=5 // pred_fallthru
        _
      %p625 = scmp.le.s32.totalorder 2, %s16
      // Predicated region
      $region53: #{tpu_custom_call.1} parent=5 // pred_check
        %p626 = pneg %p625
      $region54: #{tpu_custom_call.1} parent=5 // pred_check_branch
        %628 = sbr.rel (%p626) target = $region56
      $region55: #{tpu_custom_call.1} parent=5 // pred_region
        %s629 = ssub.s32 %s16, 2
        // Predicated region
        $region57: #{tpu_custom_call.1} parent=55 // pred_check
          %p630 = pneg %p125
        $region58: #{tpu_custom_call.1} parent=55 // pred_check_branch
          %632 = sbr.rel (%p630) target = $region60
        $region59: #{tpu_custom_call.1} parent=55 // pred_region
          %s633 = sand.u32 %s110, 1
          %s634 = scalar_lea.sflag [#allocation5], %s633
          %s635 = sand.u32 %s110, 1
          %s636 = smul.addr %s635, 4
          %s637 = scalar_lea.vmem [#allocation9], %s636
          %639 = dma.done %s634, 64
        $region60: #{tpu_custom_call.1} parent=55 // pred_fallthru
          _
      $region56: #{tpu_custom_call.1} parent=5 // pred_fallthru
        _
    $region6: #{tpu_custom_call.1} parent=1 // loop_footer
      %s20 = sadd.s32 1, %s16
    $region7: #{tpu_custom_call.1} parent=1 // loop_footer_branch
      %15 = sbr.rel target = $region3
    $region8: #{tpu_custom_call.1} parent=1 // loop_exit
      _
    %640 = vsyncpa [#allocation4], 1
    %s641 = scalar_lea.sflag [#allocation4], 1
    %642 = vsyncpa %s641, 1
    %643 = vsyncpa [#allocation7], 1
    %644 = vsyncpa [#allocation5], 1
    %s645 = scalar_lea.sflag [#allocation5], 1
    %646 = vsyncpa %s645, 1

</llo_original>
